<compile_context>
chip_gen: v7x
topology: tpu7x:2x2x1
jax: 0.10.0
libtpu: 0.0.40
codegen_flags: <defaults>
</compile_context>

<pallas_src>
import jax
import jax.numpy as jnp
from jax.experimental import pallas as pl
from jax.experimental.pallas import tpu as pltpu


def fused_mlp_softmax_kernel(x_ref, wd_ref, bd_ref, o_ref):
    # x_ref:  (TB, Dp)   wd_ref: (Dp, 2)   bd_ref: (1, 2)   o_ref: (TB, 2)
    # z[:, 0] = -(l1 - l0),  z[:, 1] = (l1 - l0)  (signs baked into wd/bd)
    z = jnp.dot(x_ref[...], wd_ref[...],
                preferred_element_type=jnp.float32) + bd_ref[...]
    # 2-class softmax == elementwise sigmoid of z (exact identity).
    o_ref[...] = 1.0 / (1.0 + jnp.exp(-z))


def _round_up(n, m):
    return (n + m - 1) // m * m


def mlp_forward(x, w1, b1, w2, b2, *, block_rows=512):
    """Fused MlPModel forward: flatten -> Linear -> Linear -> Softmax(dim=1).

    x: (B, 89) or (B, C, H, W) / (B, H, W) (flattened like the torch view()s).
    Weights are stored pre-transposed as (in_features, out_features).
    """
    # Flatten exactly like the PyTorch module's view() calls.
    if x.ndim == 4:
        x = x.reshape(-1, x.shape[1] * x.shape[-2] * x.shape[-1])
    elif x.ndim == 3:
        x = x.reshape(-1, x.shape[-2] * x.shape[-1])
    x = x.astype(jnp.float32)

    B, D = x.shape
    num_classes = w2.shape[1]
    # The sigmoid-form softmax fusion below is specific to binary output.
    # TODO(synk): for num_classes > 2 keep the collapsed matmul but do a
    # generic in-kernel softmax instead of the sigmoid identity.
    assert num_classes == 2, "fused path assumes num_classes == 2 (module default)"

    # --- Collapse the two affine layers (no nonlinearity between them). ---
    W = w1 @ w2                      # (D, 2)
    b = b1 @ w2 + b2                 # (1, 2)
    wdiff = W[:, 1:2] - W[:, 0:1]    # (D, 1)
    bdiff = b[:, 1:2] - b[:, 0:1]    # (1, 1)
    Wd = jnp.concatenate([-wdiff, wdiff], axis=1)   # (D, 2)
    bd = jnp.concatenate([-bdiff, bdiff], axis=1)   # (1, 2)

    # --- Pad to TPU-friendly shapes. ---
    Dp = _round_up(D, 128)                       # 89 -> 128 lanes (unmasked vld)
    TB = min(block_rows, _round_up(B, 8))        # batch tile, multiple of 8
    Bp = _round_up(B, TB)                        # pad batch to a tile multiple
    x_p = jnp.pad(x, ((0, Bp - B), (0, Dp - D)))
    Wd_p = jnp.pad(Wd, ((0, Dp - D), (0, 0)))    # zero rows: exact contribution 0

    grid = (Bp // TB,)
    cost = pl.CostEstimate(
        flops=2 * Bp * Dp * 2,
        transcendentals=Bp * 2,
        bytes_accessed=(x_p.size + Wd_p.size + bd.size + Bp * 2) * 4,
    )

    out = pl.pallas_call(
        fused_mlp_softmax_kernel,
        out_shape=jax.ShapeDtypeStruct((Bp, 2), jnp.float32),
        grid_spec=pltpu.PrefetchScalarGridSpec(
            num_scalar_prefetch=0,
            grid=grid,
            in_specs=[
                pl.BlockSpec((TB, Dp), lambda i: (i, 0)),   # batch-tiled input
                pl.BlockSpec((Dp, 2), lambda i: (0, 0)),    # weights: fetched once
                pl.BlockSpec((1, 2), lambda i: (0, 0)),     # bias:    fetched once
            ],
            out_specs=pl.BlockSpec((TB, 2), lambda i: (i, 0)),
        ),
        compiler_params=pltpu.CompilerParams(
            dimension_semantics=("parallel",),   # shard batch axis across TCs (v7x)
        ),
        cost_estimate=cost,
    )(x_p, Wd_p, bd)
    return out[:B]


def init_params(key, input_dim=89, hidden=128, num_classes=2):
    """Deterministic init mimicking torch.nn.Linear defaults (uniform
    +/- 1/sqrt(fan_in)); weights stored as (in, out)."""
    k1, k2, k3, k4 = jax.random.split(key, 4)
    bound1 = 1.0 / jnp.sqrt(jnp.float32(input_dim))
    bound2 = 1.0 / jnp.sqrt(jnp.float32(hidden))
    w1 = jax.random.uniform(k1, (input_dim, hidden), jnp.float32, -bound1, bound1)
    b1 = jax.random.uniform(k2, (1, hidden), jnp.float32, -bound1, bound1)
    w2 = jax.random.uniform(k3, (hidden, num_classes), jnp.float32, -bound2, bound2)
    b2 = jax.random.uniform(k4, (1, num_classes), jnp.float32, -bound2, bound2)
    return w1, b1, w2, b2


if __name__ == "__main__":
    key = jax.random.PRNGKey(0)
    kx, kp, kx2 = jax.random.split(key, 3)

    B, INPUT_DIM, HIDDEN, NUM_CLASSES = 8, 89, 128, 2
    x = jax.random.normal(kx, (B, INPUT_DIM), jnp.float32)
    w1, b1, w2, b2 = init_params(kp, INPUT_DIM, HIDDEN, NUM_CLASSES)

    out = jax.block_until_ready(mlp_forward(x, w1, b1, w2, b2))
    ref = jax.nn.softmax((x @ w1 + b1) @ w2 + b2, axis=1)
    assert out.shape == (B, NUM_CLASSES)
    assert jnp.allclose(out, ref, atol=1e-4, rtol=1e-4)
    assert jnp.allclose(jnp.sum(out, axis=1), 1.0, atol=1e-5)

    # Exercise the batch grid + padding path with a non-aligned batch.
    B2 = 1037
    x2 = jax.random.normal(kx2, (B2, INPUT_DIM), jnp.float32)
    out2 = jax.block_until_ready(mlp_forward(x2, w1, b1, w2, b2))
    ref2 = jax.nn.softmax((x2 @ w1 + b1) @ w2 + b2, axis=1)
    assert out2.shape == (B2, NUM_CLASSES)
    assert jnp.allclose(out2, ref2, atol=1e-4, rtol=1e-4)

    print("KERNEL_OK")
</pallas_src>

<mosaic_0001>
module attributes {stable_mosaic.version = 11 : i64} {
  func.func @fused_mlp_softmax_kernel(%arg0: i32, %arg1: memref<8x128xf32, #tpu.memory_space<vmem>>, %arg2: memref<128x2xf32, #tpu.memory_space<vmem>>, %arg3: memref<1x2xf32, #tpu.memory_space<vmem>>, %arg4: memref<8x2xf32, #tpu.memory_space<vmem>>) attributes {dimension_semantics = [#tpu.dimension_semantics<parallel>], iteration_bounds = array<i64: 1>, scalar_prefetch = 0 : i64, scratch_operands = 0 : i64, tpu.core_type = #tpu.core_type<tc>, window_params = [{transform_indices = @transform_0, window_bounds = array<i64: 8, 128>}, {pipeline_mode = #tpu.pipeline_mode<synchronous>, transform_indices = @transform_1, window_bounds = array<i64: 128, 2>}, {pipeline_mode = #tpu.pipeline_mode<synchronous>, transform_indices = @transform_2, window_bounds = array<i64: 1, 2>}, {transform_indices = @transform_3, window_bounds = array<i64: 8, 2>}]} {
    %c0 = arith.constant 0 : index
    %c0_0 = arith.constant 0 : index
    %0 = vector.load %arg1[%c0, %c0_0] : memref<8x128xf32, #tpu.memory_space<vmem>>, vector<8x128xf32>
    %c0_1 = arith.constant 0 : index
    %c0_2 = arith.constant 0 : index
    %1 = vector.load %arg2[%c0_1, %c0_2] : memref<128x2xf32, #tpu.memory_space<vmem>>, vector<128x2xf32>
    %cst = arith.constant dense<0.000000e+00> : vector<8x2xf32>
    %2 = tpu.matmul %0, %1, %cst {dimension_numbers = #tpu.dot_dimension_numbers<[1], [0], [0], [1], [0, 0, 1, 1], [], []>} : vector<8x128xf32>, vector<128x2xf32>, vector<8x2xf32> -> vector<8x2xf32>
    %c0_3 = arith.constant 0 : index
    %c0_4 = arith.constant 0 : index
    %3 = vector.load %arg3[%c0_3, %c0_4] : memref<1x2xf32, #tpu.memory_space<vmem>>, vector<1x2xf32>
    %4 = vector.broadcast %3 : vector<1x2xf32> to vector<8x2xf32>
    %5 = arith.addf %2, %4 : vector<8x2xf32>
    %cst_5 = arith.constant 0.000000e+00 : f32
    %6 = vector.broadcast %cst_5 : f32 to vector<8x2xf32>
    %7 = arith.subf %6, %5 : vector<8x2xf32>
    %8 = math.exp %7 : vector<8x2xf32>
    %cst_6 = arith.constant 1.000000e+00 : f32
    %9 = vector.broadcast %cst_6 : f32 to vector<8x2xf32>
    %10 = arith.addf %9, %8 : vector<8x2xf32>
    %cst_7 = arith.constant 1.000000e+00 : f32
    %11 = vector.broadcast %cst_7 : f32 to vector<8x2xf32>
    %12 = arith.divf %11, %10 : vector<8x2xf32>
    %c0_8 = arith.constant 0 : index
    %c0_9 = arith.constant 0 : index
    %13 = vector.load %arg4[%c0_8, %c0_9] : memref<8x2xf32, #tpu.memory_space<vmem>>, vector<8x2xf32>
    tpu.vector_store %arg4[%c0_8, %c0_9], %12 {strides = array<i32>} : memref<8x2xf32, #tpu.memory_space<vmem>>, vector<8x2xf32>,
    return
  }
  func.func @transform_0(%arg0: i32) -> (i32, i32) {
    %c0_i32 = arith.constant 0 : i32
    %c0_i32_0 = arith.constant 0 : i32
    return %arg0, %c0_i32 : i32, i32
  }
  func.func @transform_1(%arg0: i32) -> (i32, i32) {
    %c0_i32 = arith.constant 0 : i32
    %c0_i32_0 = arith.constant 0 : i32
    %c0_i32_1 = arith.constant 0 : i32
    return %c0_i32, %c0_i32_0 : i32, i32
  }
  func.func @transform_2(%arg0: i32) -> (i32, i32) {
    %c0_i32 = arith.constant 0 : i32
    %c0_i32_0 = arith.constant 0 : i32
    %c0_i32_1 = arith.constant 0 : i32
    return %c0_i32, %c0_i32_0 : i32, i32
  }
  func.func @transform_3(%arg0: i32) -> (i32, i32) {
    %c0_i32 = arith.constant 0 : i32
    %c0_i32_0 = arith.constant 0 : i32
    return %arg0, %c0_i32 : i32, i32
  }
}

</mosaic_0001>

<llo_original>
// kernel: tpu_custom_call.1
$region0: #{tpu_custom_call.1}
  #allocation0 [shape = 'u32[]', space=smem, size = 0x4, offset = 0x4, fixed_abs, tag = 'smem constant byte address 0x4 - core index']
  #allocation1 [shape = 'u32[144,128]{1,0:T(1,128)}', space=vmem, size = 0x12000, scoped, tag = 'internal scratch']
  %s0 = inlined_call_operand.vmem [shape: f32[8,128], index: 0, kind: input, shape index: {}]
  %s1 = inlined_call_operand.vmem [shape: f32[128,2], index: 1, kind: input, shape index: {}]
  %s2 = inlined_call_operand.vmem [shape: f32[1,2], index: 2, kind: input, shape index: {}]
  %s3 = inlined_call_operand.vmem [shape: f32[8,2], index: 3, kind: output, shape index: {}]
  %s4 = sld [smem:[#allocation0]]
  $region22: #{tpu_custom_call.1} parent=0
    _
  %s6 = ssub.s32 1, %s4
  %s7 = scalar_select 0, %s6, %s4
  // Predicated region
  $region2: #{tpu_custom_call.1} parent=0 // pred_check
    _
  $region3: #{tpu_custom_call.1} parent=0 // pred_check_branch
    %9 = sbr.rel (0) target = $region5
  $region4: #{tpu_custom_call.1} parent=0 // pred_region
    _
  $region5: #{tpu_custom_call.1} parent=0 // pred_fallthru
    _
  // Predicated region
  $region6: #{tpu_custom_call.1} parent=0 // pred_check
    _
  $region7: #{tpu_custom_call.1} parent=0 // pred_check_branch
    %11 = sbr.rel (0) target = $region9
  $region8: #{tpu_custom_call.1} parent=0 // pred_region
    _
  $region9: #{tpu_custom_call.1} parent=0 // pred_fallthru
    _
  // Predicated region
  $region10: #{tpu_custom_call.1} parent=0 // pred_check
    _
  $region11: #{tpu_custom_call.1} parent=0 // pred_check_branch
    %13 = sbr.rel (0) target = $region13
  $region12: #{tpu_custom_call.1} parent=0 // pred_region
    _
  $region13: #{tpu_custom_call.1} parent=0 // pred_fallthru
    _
  %v14 = vld [vmem:[%s0] sm:$0xff]
  %v15 = vld [vmem:[%s1] sm:$0xff]
  %v16 = vld [vmem:[%s1 + $0x8] sm:$0xff]
  %v17 = vld [vmem:[%s1 + $0x10] sm:$0xff]
  %v18 = vld [vmem:[%s1 + $0x18] sm:$0xff]
  %v19 = vld [vmem:[%s1 + $0x20] sm:$0xff]
  %v20 = vld [vmem:[%s1 + $0x28] sm:$0xff]
  %v21 = vld [vmem:[%s1 + $0x30] sm:$0xff]
  %v22 = vld [vmem:[%s1 + $0x38] sm:$0xff]
  %v23 = vld [vmem:[%s1 + $0x40] sm:$0xff]
  %v24 = vld [vmem:[%s1 + $0x48] sm:$0xff]
  %v25 = vld [vmem:[%s1 + $0x50] sm:$0xff]
  %v26 = vld [vmem:[%s1 + $0x58] sm:$0xff]
  %v27 = vld [vmem:[%s1 + $0x60] sm:$0xff]
  %v28 = vld [vmem:[%s1 + $0x68] sm:$0xff]
  %v29 = vld [vmem:[%s1 + $0x70] sm:$0xff]
  %v30 = vld [vmem:[%s1 + $0x78] sm:$0xff]
  %v31 = vld [vmem:[%s2] sm:$0x1]
  %v33 = vlaneseq
  %v34 = vshrl.u32 %v33, 7
  %v35 = vsub.s32 0, %v34
  %v36 = vrot.slane %v31, %v35
  %38 = vmatprep.subr.mxu0 0.0
  %39 = vmatpush1.msra.mxu0 %v15
  %40 = vmatprep.subr.mxu0 0.0
  %41 = vmatpush1.msra.mxu0 %v16
  %42 = vmatprep.subr.mxu0 0.0
  %43 = vmatpush1.msra.mxu0 %v17
  %44 = vmatprep.subr.mxu0 0.0
  %45 = vmatpush1.msra.mxu0 %v18
  %46 = vmatprep.subr.mxu0 0.0
  %47 = vmatpush1.msra.mxu0 %v19
  %48 = vmatprep.subr.mxu0 0.0
  %49 = vmatpush1.msra.mxu0 %v20
  %50 = vmatprep.subr.mxu0 0.0
  %51 = vmatpush1.msra.mxu0 %v21
  %52 = vmatprep.subr.mxu0 0.0
  %53 = vmatpush1.msra.mxu0 %v22
  %54 = vmatprep.subr.mxu0 0.0
  %55 = vmatpush1.msra.mxu0 %v23
  %56 = vmatprep.subr.mxu0 0.0
  %57 = vmatpush1.msra.mxu0 %v24
  %58 = vmatprep.subr.mxu0 0.0
  %59 = vmatpush1.msra.mxu0 %v25
  %60 = vmatprep.subr.mxu0 0.0
  %61 = vmatpush1.msra.mxu0 %v26
  %62 = vmatprep.subr.mxu0 0.0
  %63 = vmatpush1.msra.mxu0 %v27
  %64 = vmatprep.subr.mxu0 0.0
  %65 = vmatpush1.msra.mxu0 %v28
  %66 = vmatprep.subr.mxu0 0.0
  %67 = vmatpush1.msra.mxu0 %v29
  %68 = vmatprep.subr.mxu0 0.0
  %69 = vmatpush1.msra.mxu0 %v30
  %70 = vmatprep.subr.mxu0 0.0
  %71 = vmatpush1.msra.mxu0 0.0
  %72 = vmatprep.subr.mxu0 0.0
  %73 = vmatpush1.msra.mxu0 0.0
  %74 = vmatprep.subr.mxu0 0.0
  %75 = vmatpush1.msra.mxu0 0.0
  %76 = vmatprep.subr.mxu0 0.0
  %77 = vmatpush1.msra.mxu0 0.0
  %78 = vmatprep.subr.mxu0 0.0
  %79 = vmatpush1.msra.mxu0 0.0
  %80 = vmatprep.subr.mxu0 0.0
  %81 = vmatpush1.msra.mxu0 0.0
  %82 = vmatprep.subr.mxu0 0.0
  %83 = vmatpush1.msra.mxu0 0.0
  %84 = vmatprep.subr.mxu0 0.0
  %85 = vmatpush1.msra.mxu0 0.0
  %86 = vmatprep.subr.mxu0 0.0
  %87 = vmatpush1.msra.mxu0 0.0
  %88 = vmatprep.subr.mxu0 0.0
  %89 = vmatpush1.msra.mxu0 0.0
  %90 = vmatprep.subr.mxu0 0.0
  %91 = vmatpush1.msra.mxu0 0.0
  %92 = vmatprep.subr.mxu0 0.0
  %93 = vmatpush1.msra.mxu0 0.0
  %94 = vmatprep.subr.mxu0 0.0
  %95 = vmatpush1.msra.mxu0 0.0
  %96 = vmatprep.subr.mxu0 0.0
  %97 = vmatpush1.msra.mxu0 0.0
  %98 = vmatprep.subr.mxu0 0.0
  %99 = vmatpush1.msra.mxu0 0.0
  %100 = vmatprep.subr.mxu0 0.0
  %101 = vmatpush1.msra.mxu0 0.0
  %102 = vmatprep.mubr.f32.mxu0 0.0
  %103 = vmatmul.mubr.f32.gmra.mrb[0].mxu0 %v14
  %v104 = vpop.f32.mrb[0].mxu0
  %v105 = vadd.f32 %v36, %v104
  %v106 = vpop.f32.mrb[0].mxu0
  %107 = vdwg.mxu0
  %v108 = vsub.f32 0.0, %v105
  %v109 = vmul.f32 %v108, 1.442695
  %v110 = vpow.pop %v109
  %v111 = vadd.f32 %v110, 1.0
  %v112 = vrcp.pop %v111
  %v113 = vmul.f32 1.0, %v112
  %vm114 = vcmask 15360
  %115 = vst.msk [vmem:[%s3] sm:$0xff] %vm114, %v113
  // Predicated region
  $region14: #{tpu_custom_call.1} parent=0 // pred_check
    _
  $region15: #{tpu_custom_call.1} parent=0 // pred_check_branch
    %117 = sbr.rel (0) target = $region17
  $region16: #{tpu_custom_call.1} parent=0 // pred_region
    _
  $region17: #{tpu_custom_call.1} parent=0 // pred_fallthru
    _
  // Predicated region
  $region18: #{tpu_custom_call.1} parent=0 // pred_check
    _
  $region19: #{tpu_custom_call.1} parent=0 // pred_check_branch
    %119 = sbr.rel (0) target = $region21
  $region20: #{tpu_custom_call.1} parent=0 // pred_region
    _
  $region21: #{tpu_custom_call.1} parent=0 // pred_fallthru
    _

</llo_original>
